<compile_context>
chip_gen: v7x
topology: tpu7x:2x2x1
jax: 0.10.0
libtpu: 0.0.40
codegen_flags: <defaults>
</compile_context>

<pallas_src>
import jax
import jax.numpy as jnp
from jax.experimental import pallas as pl
from jax.experimental.pallas import tpu as pltpu


def _round_up(x: int, m: int) -> int:
    return pl.cdiv(x, m) * m


def _round_down(x: int, m: int) -> int:
    return (x // m) * m


def _residual_kernel(x_ref, t_ref, w_ref, b_ref, g_ref, beta_ref, o_ref):
    # Sublayer Linear(D, D) on the MXU: native-dtype operands, f32 accumulation.
    sub = jnp.dot(t_ref[...], w_ref[...], preferred_element_type=jnp.float32)

    # dropout(p=0.0) is identity; residual add + bias, all in f32.
    y = x_ref[...].astype(jnp.float32) + sub + b_ref[...].astype(jnp.float32)

    # LayerNorm over the last dim, eps = 1e-5 (PyTorch default).
    # Two-pass variance (numerically robust) + direct epilogue (low vreg pressure):
    # only `centered` stays live as a (tile, D) f32; everything else is (tile, 1)
    # scalars or cheap (1, D) broadcasts.
    mean = jnp.mean(y, axis=-1, keepdims=True)
    centered = y - mean
    var = jnp.mean(centered * centered, axis=-1, keepdims=True)
    inv = jax.lax.rsqrt(var + 1e-5)

    o_ref[...] = (
        (centered * inv) * g_ref[...].astype(jnp.float32)
        + beta_ref[...].astype(jnp.float32)
    ).astype(o_ref.dtype)


def residual_forward(inp, sub_in, w, b, gamma, beta, *, row_tile=2048):
    """inp, sub_in: (B, S, D).  w: (D, D), b/gamma/beta: (D,)."""
    B, S, D = inp.shape
    N = B * S

    act_bytes = jnp.dtype(inp.dtype).itemsize
    par_bytes = jnp.dtype(w.dtype).itemsize
    sublane = 16 if inp.dtype == jnp.bfloat16 else 8

    # Generation-aware VMEM budget: half of physical VMEM (v7x: 32 MiB,
    # v5e/v6e: 64 MiB).  Falls back to the conservative v7x-safe value.
    try:
        vmem_cap = int(pltpu.get_tpu_info().vmem_capacity_bytes)
    except Exception:
        vmem_cap = 64 << 20
    budget = min(vmem_cap // 2, 64 << 20)

    # Per-row VMEM cost: double-buffered x/t/out tiles + in-kernel f32 temporaries
    # (y / centered).  Resident params are single-buffered (pl.Buffered(1)).
    per_row = 2 * 3 * D * act_bytes + 2 * D * 4
    param_resident = (D * D + 3 * D) * par_bytes
    tile_budget = max(sublane, _round_down(max(budget - param_resident, 0) // per_row,
                                           sublane))

    # Row tile: as large as requested, within the VMEM budget, never (much) bigger
    # than the problem; multiple of the dtype sublane tile.
    tile = min(int(row_tile), tile_budget, _round_up(N, sublane))
    tile = max(sublane, _round_up(tile, sublane))
    # Give both v7x TensorCores work when the problem allows >1 step.
    if pl.cdiv(N, tile) < 2 and N > sublane:
        tile = _round_up(pl.cdiv(N, 2), sublane)
    grid = (pl.cdiv(N, tile),)

    x2 = inp.reshape(N, D)
    t2 = sub_in.reshape(N, D)
    b2 = b.reshape(1, D)
    g2 = gamma.reshape(1, D)
    beta2 = beta.reshape(1, D)

    # Explicit scoped-VMEM sizing (I/O double buffers + f32 temps + resident params),
    # with a little headroom for Mosaic internals; clamp to physical VMEM.
    vmem_need = 2 * 3 * tile * D * act_bytes + 2 * tile * D * 4 + param_resident
    vmem_limit = int(min(max(vmem_need + (2 << 20), 8 << 20), vmem_cap))

    cost = pl.CostEstimate(
        flops=2 * N * D * D + 10 * N * D,
        transcendentals=N,  # one rsqrt per row
        bytes_accessed=3 * N * D * act_bytes + (D * D + 3 * D) * par_bytes,
    )

    resident = dict(pipeline_mode=pl.Buffered(1))  # constant index_map: no re-DMA

    out = pl.pallas_call(
        _residual_kernel,
        out_shape=jax.ShapeDtypeStruct((N, D), inp.dtype),
        grid_spec=pltpu.PrefetchScalarGridSpec(
            num_scalar_prefetch=0,
            grid=grid,
            in_specs=[
                pl.BlockSpec((tile, D), lambda i: (i, 0)),          # inp rows
                pl.BlockSpec((tile, D), lambda i: (i, 0)),          # sublayer input rows
                pl.BlockSpec((D, D), lambda i: (0, 0), **resident),  # Linear weight
                pl.BlockSpec((1, D), lambda i: (0, 0), **resident),  # Linear bias
                pl.BlockSpec((1, D), lambda i: (0, 0), **resident),  # LN gamma
                pl.BlockSpec((1, D), lambda i: (0, 0), **resident),  # LN beta
            ],
            out_specs=pl.BlockSpec((tile, D), lambda i: (i, 0)),
        ),
        compiler_params=pltpu.CompilerParams(
            dimension_semantics=("parallel",),
            vmem_limit_bytes=vmem_limit,
        ),
        cost_estimate=cost,
    )(x2, t2, w, b2, g2, beta2)

    return out.reshape(B, S, D)


def _reference(inp, sub_in, w, b, gamma, beta):
    y = inp.astype(jnp.float32) + (
        sub_in.astype(jnp.float32) @ w.astype(jnp.float32) + b.astype(jnp.float32)
    )
    mean = jnp.mean(y, axis=-1, keepdims=True)
    var = jnp.mean((y - mean) ** 2, axis=-1, keepdims=True)
    yhat = (y - mean) * jax.lax.rsqrt(var + 1e-5)
    return (yhat * gamma + beta).astype(inp.dtype)


if __name__ == "__main__":
    B, S, D = 2, 8, 128  # small shapes; D = lane-dense feature dim

    key = jax.random.PRNGKey(0)
    k_inp, k_sub, k_w = jax.random.split(key, 3)

    inp = jax.random.normal(k_inp, (B, S, D), dtype=jnp.float32)
    sub_in = jax.random.normal(k_sub, (B, S, D), dtype=jnp.float32)

    # Deterministic "sublayer" Linear(D, D) params (synthetic init, no checkpoint).
    w = jax.random.normal(k_w, (D, D), dtype=jnp.float32) * (1.0 / jnp.sqrt(D))
    b = jnp.zeros((D,), dtype=jnp.float32)

    # LayerNorm affine params: PyTorch default init (ones / zeros).
    gamma = jnp.ones((D,), dtype=jnp.float32)
    beta = jnp.zeros((D,), dtype=jnp.float32)

    out = residual_forward(inp, sub_in, w, b, gamma, beta)
    out = jax.block_until_ready(out)

    ref = _reference(inp, sub_in, w, b, gamma, beta)
    assert out.shape == (B, S, D)
    assert jnp.allclose(out, ref, atol=1e-4, rtol=1e-4), "mismatch vs reference"

    print("KERNEL_OK")
</pallas_src>

<mosaic_0001>
module attributes {stable_mosaic.version = 11 : i64} {
  func.func @_residual_kernel(%arg0: i32, %arg1: memref<8x128xf32, #tpu.memory_space<vmem>>, %arg2: memref<8x128xf32, #tpu.memory_space<vmem>>, %arg3: memref<128x128xf32, #tpu.memory_space<vmem>>, %arg4: memref<1x128xf32, #tpu.memory_space<vmem>>, %arg5: memref<1x128xf32, #tpu.memory_space<vmem>>, %arg6: memref<1x128xf32, #tpu.memory_space<vmem>>, %arg7: memref<8x128xf32, #tpu.memory_space<vmem>>) attributes {dimension_semantics = [#tpu.dimension_semantics<parallel>], iteration_bounds = array<i64: 2>, scalar_prefetch = 0 : i64, scratch_operands = 0 : i64, tpu.core_type = #tpu.core_type<tc>, window_params = [{transform_indices = @transform_0, window_bounds = array<i64: 8, 128>}, {transform_indices = @transform_1, window_bounds = array<i64: 8, 128>}, {pipeline_mode = #tpu.pipeline_mode<synchronous>, transform_indices = @transform_2, window_bounds = array<i64: 128, 128>}, {pipeline_mode = #tpu.pipeline_mode<synchronous>, transform_indices = @transform_3, window_bounds = array<i64: 1, 128>}, {pipeline_mode = #tpu.pipeline_mode<synchronous>, transform_indices = @transform_4, window_bounds = array<i64: 1, 128>}, {pipeline_mode = #tpu.pipeline_mode<synchronous>, transform_indices = @transform_5, window_bounds = array<i64: 1, 128>}, {transform_indices = @transform_6, window_bounds = array<i64: 8, 128>}]} {
    %c0 = arith.constant 0 : index
    %c0_0 = arith.constant 0 : index
    %0 = vector.load %arg2[%c0, %c0_0] : memref<8x128xf32, #tpu.memory_space<vmem>>, vector<8x128xf32>
    %c0_1 = arith.constant 0 : index
    %c0_2 = arith.constant 0 : index
    %1 = vector.load %arg3[%c0_1, %c0_2] : memref<128x128xf32, #tpu.memory_space<vmem>>, vector<128x128xf32>
    %cst = arith.constant dense<0.000000e+00> : vector<8x128xf32>
    %2 = tpu.matmul %0, %1, %cst {dimension_numbers = #tpu.dot_dimension_numbers<[1], [0], [0], [1], [0, 0, 1, 1], [], []>} : vector<8x128xf32>, vector<128x128xf32>, vector<8x128xf32> -> vector<8x128xf32>
    %c0_3 = arith.constant 0 : index
    %c0_4 = arith.constant 0 : index
    %3 = vector.load %arg1[%c0_3, %c0_4] : memref<8x128xf32, #tpu.memory_space<vmem>>, vector<8x128xf32>
    %4 = arith.addf %3, %2 : vector<8x128xf32>
    %c0_5 = arith.constant 0 : index
    %c0_6 = arith.constant 0 : index
    %5 = vector.load %arg4[%c0_5, %c0_6] : memref<1x128xf32, #tpu.memory_space<vmem>>, vector<1x128xf32>
    %6 = vector.broadcast %5 : vector<1x128xf32> to vector<8x128xf32>
    %7 = arith.addf %4, %6 : vector<8x128xf32>
    %cst_7 = arith.constant dense<0.000000e+00> : vector<8xf32>
    %8 = vector.multi_reduction <add>, %7, %cst_7 [1] : vector<8x128xf32> to vector<8xf32>
    %9 = vector.shape_cast %8 : vector<8xf32> to vector<8x1xf32>
    %cst_8 = arith.constant 1.280000e+02 : f32
    %10 = vector.broadcast %cst_8 : f32 to vector<8x1xf32>
    %11 = arith.divf %9, %10 : vector<8x1xf32>
    %12 = vector.broadcast %11 : vector<8x1xf32> to vector<8x128xf32>
    %13 = arith.subf %7, %12 : vector<8x128xf32>
    %14 = arith.mulf %13, %13 : vector<8x128xf32>
    %cst_9 = arith.constant dense<0.000000e+00> : vector<8xf32>
    %15 = vector.multi_reduction <add>, %14, %cst_9 [1] : vector<8x128xf32> to vector<8xf32>
    %16 = vector.shape_cast %15 : vector<8xf32> to vector<8x1xf32>
    %cst_10 = arith.constant 1.280000e+02 : f32
    %17 = vector.broadcast %cst_10 : f32 to vector<8x1xf32>
    %18 = arith.divf %16, %17 : vector<8x1xf32>
    %cst_11 = arith.constant 9.99999974E-6 : f32
    %19 = vector.broadcast %cst_11 : f32 to vector<8x1xf32>
    %20 = arith.addf %18, %19 : vector<8x1xf32>
    %21 = math.rsqrt %20 : vector<8x1xf32>
    %22 = vector.broadcast %21 : vector<8x1xf32> to vector<8x128xf32>
    %23 = arith.mulf %13, %22 : vector<8x128xf32>
    %c0_12 = arith.constant 0 : index
    %c0_13 = arith.constant 0 : index
    %24 = vector.load %arg5[%c0_12, %c0_13] : memref<1x128xf32, #tpu.memory_space<vmem>>, vector<1x128xf32>
    %25 = vector.broadcast %24 : vector<1x128xf32> to vector<8x128xf32>
    %26 = arith.mulf %23, %25 : vector<8x128xf32>
    %c0_14 = arith.constant 0 : index
    %c0_15 = arith.constant 0 : index
    %27 = vector.load %arg6[%c0_14, %c0_15] : memref<1x128xf32, #tpu.memory_space<vmem>>, vector<1x128xf32>
    %28 = vector.broadcast %27 : vector<1x128xf32> to vector<8x128xf32>
    %29 = arith.addf %26, %28 : vector<8x128xf32>
    %c0_16 = arith.constant 0 : index
    %c0_17 = arith.constant 0 : index
    %30 = vector.load %arg7[%c0_16, %c0_17] : memref<8x128xf32, #tpu.memory_space<vmem>>, vector<8x128xf32>
    tpu.vector_store %arg7[%c0_16, %c0_17], %29 {strides = array<i32>} : memref<8x128xf32, #tpu.memory_space<vmem>>, vector<8x128xf32>,
    return
  }
  func.func @transform_0(%arg0: i32) -> (i32, i32) {
    %c0_i32 = arith.constant 0 : i32
    %c0_i32_0 = arith.constant 0 : i32
    return %arg0, %c0_i32 : i32, i32
  }
  func.func @transform_1(%arg0: i32) -> (i32, i32) {
    %c0_i32 = arith.constant 0 : i32
    %c0_i32_0 = arith.constant 0 : i32
    return %arg0, %c0_i32 : i32, i32
  }
  func.func @transform_2(%arg0: i32) -> (i32, i32) {
    %c0_i32 = arith.constant 0 : i32
    %c0_i32_0 = arith.constant 0 : i32
    %c0_i32_1 = arith.constant 0 : i32
    return %c0_i32, %c0_i32_0 : i32, i32
  }
  func.func @transform_3(%arg0: i32) -> (i32, i32) {
    %c0_i32 = arith.constant 0 : i32
    %c0_i32_0 = arith.constant 0 : i32
    %c0_i32_1 = arith.constant 0 : i32
    return %c0_i32, %c0_i32_0 : i32, i32
  }
  func.func @transform_4(%arg0: i32) -> (i32, i32) {
    %c0_i32 = arith.constant 0 : i32
    %c0_i32_0 = arith.constant 0 : i32
    %c0_i32_1 = arith.constant 0 : i32
    return %c0_i32, %c0_i32_0 : i32, i32
  }
  func.func @transform_5(%arg0: i32) -> (i32, i32) {
    %c0_i32 = arith.constant 0 : i32
    %c0_i32_0 = arith.constant 0 : i32
    %c0_i32_1 = arith.constant 0 : i32
    return %c0_i32, %c0_i32_0 : i32, i32
  }
  func.func @transform_6(%arg0: i32) -> (i32, i32) {
    %c0_i32 = arith.constant 0 : i32
    %c0_i32_0 = arith.constant 0 : i32
    return %arg0, %c0_i32 : i32, i32
  }
}

</mosaic_0001>

<llo_original>
// kernel: tpu_custom_call.1
$region0: #{tpu_custom_call.1}
  #allocation0 [shape = 'u32[]', space=smem, size = 0x4, offset = 0x4, fixed_abs, tag = 'smem constant byte address 0x4 - core index']
  #allocation1 [shape = 'u32[144,128]{1,0:T(1,128)}', space=vmem, size = 0x12000, scoped, tag = 'internal scratch']
  %s0 = inlined_call_operand.hbm [shape: f32[16,128], index: 0, kind: input, shape index: {}]
  %s1 = inlined_call_operand.hbm [shape: f32[16,128], index: 1, kind: input, shape index: {}]
  %s2 = inlined_call_operand.hbm [shape: f32[128,128], index: 2, kind: input, shape index: {}]
  %s3 = inlined_call_operand.vmem [shape: f32[1,128], index: 3, kind: input, shape index: {}]
  %s4 = inlined_call_operand.vmem [shape: f32[1,128], index: 4, kind: input, shape index: {}]
  %s5 = inlined_call_operand.vmem [shape: f32[1,128], index: 5, kind: input, shape index: {}]
  %s6 = inlined_call_operand.hbm [shape: f32[16,128], index: 6, kind: output, shape index: {}]
  %s7 = sld [smem:[#allocation0]]
  $region69: #{tpu_custom_call.1} parent=0
    _
  %s9 = ssub.s32 1, %s7
  %s10 = scalar_select 0, %s9, %s7
  $region1: #{tpu_custom_call.1} parent=0
    #allocation2 [shape = 'u8[8192]{0}', space=vmem, size = 0x2000, scoped, tag = 'input window, operand 0']
    #allocation3 [shape = 's32[2]{0}', space=sflag, size = 0x8, scoped, tag = 'scoped memory for tpu_custom_call.1']
    #allocation4 [shape = 's32[2]{0}', space=sflag, size = 0x8, scoped, tag = 'scoped memory for tpu_custom_call.1']
    #allocation5 [shape = 'u8[8192]{0}', space=vmem, size = 0x2000, scoped, tag = 'input window, operand 1']
    #allocation6 [shape = 's32[2]{0}', space=sflag, size = 0x8, scoped, tag = 'scoped memory for tpu_custom_call.1']
    #allocation7 [shape = 'u8[65536]{0}', space=vmem, size = 0x10000, scoped, tag = 'input window, operand 2, single buffered']
    #allocation8 [shape = 'u8[8192]{0}', space=vmem, size = 0x2000, scoped, tag = 'output window, operand 0']
    %11 = vsyncpa [#allocation3], 0
    %s12 = scalar_lea.sflag [#allocation3], 1
    %13 = vsyncpa %s12, 0
    %14 = vsyncpa [#allocation6], 0
    %s15 = scalar_lea.sflag [#allocation6], 1
    %16 = vsyncpa %s15, 0
    %17 = vsyncpa [#allocation4], 0
    %s18 = scalar_lea.sflag [#allocation4], 1
    %19 = vsyncpa %s18, 0
    loop: start=0, step=1, limit=4
    $region2: #{tpu_custom_call.1} parent=1 // loop_pre_header
      _
    $region3: #{tpu_custom_call.1} parent=1 // loop_header
      %s21 = sphi 0, %s25
      %p22 = scmp.ge.s32.totalorder %s21, 4
      %s31 = sphi 0, %s33
      %s34 = sphi 0, %s31
      %s35 = sphi 0, %s34
      %s51 = sphi 0, %s35
      %s57 = sphi 0, %s59
      %s60 = sphi 0, %s57
      %s61 = sphi 0, %s60
      %s77 = sphi 0, %s61
      %s81 = sphi 0, %s81
      %s83 = sphi 0, %s81
      %s84 = sphi 0, %s83
      %s98 = sphi 0, %s84
      %s102 = sphi 0, %s102
      %s104 = sphi 0, %s102
      %s105 = sphi 0, %s104
      %s119 = sphi 0, %s105
      %s123 = sphi 0, %s123
      %s125 = sphi 0, %s123
      %s126 = sphi 0, %s125
      %s140 = sphi 0, %s126
      %s144 = sphi 0, %s144
      %s146 = sphi 0, %s144
      %s147 = sphi 0, %s146
      %s161 = sphi 0, %s147
      %s167 = sphi 0, %s169
      %s170 = sphi 0, %s167
      %s171 = sphi 0, %s170
      %s187 = sphi 0, %s171
    $region4: #{tpu_custom_call.1} parent=1 // loop_header_branch
      %24 = sbr.rel (%p22) target = $region8
    $region5: #{tpu_custom_call.1} parent=1 // loop_body
      %s26 = ssub.s32 %s21, 1
      %s27 = ssub.s32 %s21, 2
      %s28 = sadd.s32 %s21, 1
      %s29 = ssub.s32 %s21, %s28
      %p30 = scmp.eq.s32.totalorder %s29, 0
      %s32 = sadd.s32 %s31, 1
      %s33 = scalar_select %p30, %s31, %s32
      %p36 = pneg %p30
      %p37 = scmp.eq.s32.totalorder %s21, 1
      %p38 = por %p36, %p37
      %p39 = scmp.ne.s32.totalorder %s31, %s34
      %p40 = scmp.eq.s32.totalorder %s21, 0
      %p41 = por %p39, %p40
      %p42 = scmp.ne.s32.totalorder %s31, %s34
      %p43 = scmp.eq.s32.totalorder %s26, 1
      %p44 = por %p42, %p43
      %p45 = scmp.ne.s32.totalorder %s34, %s35
      %p46 = scmp.eq.s32.totalorder %s26, 0
      %p47 = por %p45, %p46
      %p48 = scmp.ne.s32.totalorder %s34, %s35
      %p49 = scmp.eq.s32.totalorder %s27, 1
      %p50 = por %p48, %p49
      %p52 = scmp.ne.s32.totalorder %s35, %s51
      %p53 = scmp.eq.s32.totalorder %s27, 0
      %p54 = por %p52, %p53
      %s55 = ssub.s32 %s21, %s28
      %p56 = scmp.eq.s32.totalorder %s55, 0
      %s58 = sadd.s32 %s57, 1
      %s59 = scalar_select %p56, %s57, %s58
      %p62 = pneg %p56
      %p63 = scmp.eq.s32.totalorder %s21, 1
      %p64 = por %p62, %p63
      %p65 = scmp.ne.s32.totalorder %s57, %s60
      %p66 = scmp.eq.s32.totalorder %s21, 0
      %p67 = por %p65, %p66
      %p68 = scmp.ne.s32.totalorder %s57, %s60
      %p69 = scmp.eq.s32.totalorder %s26, 1
      %p70 = por %p68, %p69
      %p71 = scmp.ne.s32.totalorder %s60, %s61
      %p72 = scmp.eq.s32.totalorder %s26, 0
      %p73 = por %p71, %p72
      %p74 = scmp.ne.s32.totalorder %s60, %s61
      %p75 = scmp.eq.s32.totalorder %s27, 1
      %p76 = por %p74, %p75
      %p78 = scmp.ne.s32.totalorder %s61, %s77
      %p79 = scmp.eq.s32.totalorder %s27, 0
      %p80 = por %p78, %p79
      %s82 = sadd.s32 %s81, 1
      %p85 = scmp.eq.s32.totalorder %s21, 1
      %p86 = scmp.ne.s32.totalorder %s81, %s83
      %p87 = scmp.eq.s32.totalorder %s21, 0
      %p88 = por %p86, %p87
      %p89 = scmp.ne.s32.totalorder %s81, %s83
      %p90 = scmp.eq.s32.totalorder %s26, 1
      %p91 = por %p89, %p90
      %p92 = scmp.ne.s32.totalorder %s83, %s84
      %p93 = scmp.eq.s32.totalorder %s26, 0
      %p94 = por %p92, %p93
      %p95 = scmp.ne.s32.totalorder %s83, %s84
      %p96 = scmp.eq.s32.totalorder %s27, 1
      %p97 = por %p95, %p96
      %p99 = scmp.ne.s32.totalorder %s84, %s98
      %p100 = scmp.eq.s32.totalorder %s27, 0
      %p101 = por %p99, %p100
      %s103 = sadd.s32 %s102, 1
      %p106 = scmp.eq.s32.totalorder %s21, 1
      %p107 = scmp.ne.s32.totalorder %s102, %s104
      %p108 = scmp.eq.s32.totalorder %s21, 0
      %p109 = por %p107, %p108
      %p110 = scmp.ne.s32.totalorder %s102, %s104
      %p111 = scmp.eq.s32.totalorder %s26, 1
      %p112 = por %p110, %p111
      %p113 = scmp.ne.s32.totalorder %s104, %s105
      %p114 = scmp.eq.s32.totalorder %s26, 0
      %p115 = por %p113, %p114
      %p116 = scmp.ne.s32.totalorder %s104, %s105
      %p117 = scmp.eq.s32.totalorder %s27, 1
      %p118 = por %p116, %p117
      %p120 = scmp.ne.s32.totalorder %s105, %s119
      %p121 = scmp.eq.s32.totalorder %s27, 0
      %p122 = por %p120, %p121
      %s124 = sadd.s32 %s123, 1
      %p127 = scmp.eq.s32.totalorder %s21, 1
      %p128 = scmp.ne.s32.totalorder %s123, %s125
      %p129 = scmp.eq.s32.totalorder %s21, 0
      %p130 = por %p128, %p129
      %p131 = scmp.ne.s32.totalorder %s123, %s125
      %p132 = scmp.eq.s32.totalorder %s26, 1
      %p133 = por %p131, %p132
      %p134 = scmp.ne.s32.totalorder %s125, %s126
      %p135 = scmp.eq.s32.totalorder %s26, 0
      %p136 = por %p134, %p135
      %p137 = scmp.ne.s32.totalorder %s125, %s126
      %p138 = scmp.eq.s32.totalorder %s27, 1
      %p139 = por %p137, %p138
      %p141 = scmp.ne.s32.totalorder %s126, %s140
      %p142 = scmp.eq.s32.totalorder %s27, 0
      %p143 = por %p141, %p142
      %s145 = sadd.s32 %s144, 1
      %p148 = scmp.eq.s32.totalorder %s21, 1
      %p149 = scmp.ne.s32.totalorder %s144, %s146
      %p150 = scmp.eq.s32.totalorder %s21, 0
      %p151 = por %p149, %p150
      %p152 = scmp.ne.s32.totalorder %s144, %s146
      %p153 = scmp.eq.s32.totalorder %s26, 1
      %p154 = por %p152, %p153
      %p155 = scmp.ne.s32.totalorder %s146, %s147
      %p156 = scmp.eq.s32.totalorder %s26, 0
      %p157 = por %p155, %p156
      %p158 = scmp.ne.s32.totalorder %s146, %s147
      %p159 = scmp.eq.s32.totalorder %s27, 1
      %p160 = por %p158, %p159
      %p162 = scmp.ne.s32.totalorder %s147, %s161
      %p163 = scmp.eq.s32.totalorder %s27, 0
      %p164 = por %p162, %p163
      %s165 = ssub.s32 %s21, %s28
      %p166 = scmp.eq.s32.totalorder %s165, 0
      %s168 = sadd.s32 %s167, 1
      %s169 = scalar_select %p166, %s167, %s168
      %p172 = pneg %p166
      %p173 = scmp.eq.s32.totalorder %s21, 1
      %p174 = por %p172, %p173
      %p175 = scmp.ne.s32.totalorder %s167, %s170
      %p176 = scmp.eq.s32.totalorder %s21, 0
      %p177 = por %p175, %p176
      %p178 = scmp.ne.s32.totalorder %s167, %s170
      %p179 = scmp.eq.s32.totalorder %s26, 1
      %p180 = por %p178, %p179
      %p181 = scmp.ne.s32.totalorder %s170, %s171
      %p182 = scmp.eq.s32.totalorder %s26, 0
      %p183 = por %p181, %p182
      %p184 = scmp.ne.s32.totalorder %s170, %s171
      %p185 = scmp.eq.s32.totalorder %s27, 1
      %p186 = por %p184, %p185
      %p188 = scmp.ne.s32.totalorder %s171, %s187
      %p189 = scmp.eq.s32.totalorder %s27, 0
      %p190 = por %p188, %p189
      %p191 = scmp.le.s32.totalorder 1, %s21
      %p192 = scmp.lt.s32.totalorder %s21, 3
      %p193 = pnand %p191, %p192
      %p194 = pneg %p193
      // Predicated region
      $region9: #{tpu_custom_call.1} parent=5 // pred_check
        _
      $region10: #{tpu_custom_call.1} parent=5 // pred_check_branch
        %196 = sbr.rel (%p193) target = $region12
      $region11: #{tpu_custom_call.1} parent=5 // pred_region
        %s197 = ssub.s32 %s21, 1
        // Predicated region
        $region13: #{tpu_custom_call.1} parent=11 // pred_check
          %p198 = pneg %p94
        $region14: #{tpu_custom_call.1} parent=11 // pred_check_branch
          %200 = sbr.rel (%p198) target = $region16
        $region15: #{tpu_custom_call.1} parent=11 // pred_region
          %s202 = ssub.s32 2048, 2048
          %203 = vsyncadd [#allocation6], %s202
          %s204 = sshll.u32 [#allocation7], 4
          %s205 = int_to_ptr.vmem [resolvable:$true] %s204
          %210 = dma.hbm_to_vmem [thread:$0]  %s2, 2048, %s205, [#allocation6], 128, 128, 8
        $region16: #{tpu_custom_call.1} parent=11 // pred_fallthru
          _
        // Predicated region
        $region17: #{tpu_custom_call.1} parent=11 // pred_check
          %p211 = pneg %p115
        $region18: #{tpu_custom_call.1} parent=11 // pred_check_branch
          %213 = sbr.rel (%p211) target = $region20
        $region19: #{tpu_custom_call.1} parent=11 // pred_region
          _
        $region20: #{tpu_custom_call.1} parent=11 // pred_fallthru
          _
        // Predicated region
        $region21: #{tpu_custom_call.1} parent=11 // pred_check
          %p214 = pneg %p136
        $region22: #{tpu_custom_call.1} parent=11 // pred_check_branch
          %216 = sbr.rel (%p214) target = $region24
        $region23: #{tpu_custom_call.1} parent=11 // pred_region
          _
        $region24: #{tpu_custom_call.1} parent=11 // pred_fallthru
          _
        // Predicated region
        $region25: #{tpu_custom_call.1} parent=11 // pred_check
          %p217 = pneg %p157
        $region26: #{tpu_custom_call.1} parent=11 // pred_check_branch
          %219 = sbr.rel (%p217) target = $region28
        $region27: #{tpu_custom_call.1} parent=11 // pred_region
          _
        $region28: #{tpu_custom_call.1} parent=11 // pred_fallthru
          _
      $region12: #{tpu_custom_call.1} parent=5 // pred_fallthru
        _
      %p220 = scmp.lt.s32.totalorder %s21, 2
      // Predicated region
      $region29: #{tpu_custom_call.1} parent=5 // pred_check
        %p221 = pneg %p220
      $region30: #{tpu_custom_call.1} parent=5 // pred_check_branch
        %223 = sbr.rel (%p221) target = $region32
      $region31: #{tpu_custom_call.1} parent=5 // pred_region
        // Predicated region
        $region33: #{tpu_custom_call.1} parent=31 // pred_check
          %p224 = pneg %p41
        $region34: #{tpu_custom_call.1} parent=31 // pred_check_branch
          %226 = sbr.rel (%p224) target = $region36
        $region35: #{tpu_custom_call.1} parent=31 // pred_region
          %s227 = sand.u32 %s31, 1
          %s228 = scalar_lea.sflag [#allocation3], %s227
          %s229 = sand.u32 %s31, 1
          %s230 = smul.addr %s229, 8
          %s231 = scalar_lea.vmem [#allocation2], %s230
          %s233 = ssub.s32 128, 128
          %234 = vsyncadd %s228, %s233
          %s235 = smul.addr %s21, 128
          %s236 = scalar_lea.hbm %s0, %s235
          %s238 = sshll.u32 %s231, 4
          %s239 = int_to_ptr.vmem [resolvable:$true] %s238
          %241 = dma.hbm_to_vmem [thread:$0]  %s236, 128, %s239, %s228
        $region36: #{tpu_custom_call.1} parent=31 // pred_fallthru
          _
        // Predicated region
        $region37: #{tpu_custom_call.1} parent=31 // pred_check
          %p242 = pneg %p67
        $region38: #{tpu_custom_call.1} parent=31 // pred_check_branch
          %244 = sbr.rel (%p242) target = $region40
        $region39: #{tpu_custom_call.1} parent=31 // pred_region
          %s245 = sand.u32 %s21, 1
          %s246 = scalar_lea.sflag [#allocation6], %s245
          %s247 = sand.u32 %s57, 1
          %s248 = smul.addr %s247, 8
          %s249 = scalar_lea.vmem [#allocation5], %s248
          %s251 = ssub.s32 128, 128
          %252 = vsyncadd %s246, %s251
          %s253 = smul.addr %s21, 128
          %s254 = scalar_lea.hbm %s1, %s253
          %s256 = sshll.u32 %s249, 4
          %s257 = int_to_ptr.vmem [resolvable:$true] %s256
          %259 = dma.hbm_to_vmem [thread:$0]  %s254, 128, %s257, %s246
        $region40: #{tpu_custom_call.1} parent=31 // pred_fallthru
          _
      $region32: #{tpu_custom_call.1} parent=5 // pred_fallthru
        _
      %p260 = scmp.le.s32.totalorder 1, %s21
      %p261 = scmp.lt.s32.totalorder %s21, 3
      %p262 = pnand %p260, %p261
      %p263 = pneg %p262
      // Predicated region
      $region41: #{tpu_custom_call.1} parent=5 // pred_check
        _
      $region42: #{tpu_custom_call.1} parent=5 // pred_check_branch
        %265 = sbr.rel (%p262) target = $region44
      $region43: #{tpu_custom_call.1} parent=5 // pred_region
        %s266 = ssub.s32 %s21, 1
        %s267 = sand.u32 %s34, 1
        %s268 = scalar_lea.sflag [#allocation3], %s267
        %s269 = sand.u32 %s34, 1
        %s270 = smul.addr %s269, 8
        %s271 = scalar_lea.vmem [#allocation2], %s270
        // Predicated region
        $region45: #{tpu_custom_call.1} parent=43 // pred_check
          %p272 = pneg %p47
        $region46: #{tpu_custom_call.1} parent=43 // pred_check_branch
          %274 = sbr.rel (%p272) target = $region48
        $region47: #{tpu_custom_call.1} parent=43 // pred_region
          %275 = dma.done %s268, 128
        $region48: #{tpu_custom_call.1} parent=43 // pred_fallthru
          _
        %s276 = sand.u32 %s26, 1
        %s277 = scalar_lea.sflag [#allocation6], %s276
        %s278 = sand.u32 %s60, 1
        %s279 = smul.addr %s278, 8
        %s280 = scalar_lea.vmem [#allocation5], %s279
        // Predicated region
        $region49: #{tpu_custom_call.1} parent=43 // pred_check
          %p281 = pneg %p73
        $region50: #{tpu_custom_call.1} parent=43 // pred_check_branch
          %283 = sbr.rel (%p281) target = $region52
        $region51: #{tpu_custom_call.1} parent=43 // pred_region
          %284 = dma.done %s277, 128
        $region52: #{tpu_custom_call.1} parent=43 // pred_fallthru
          _
        // Predicated region
        $region53: #{tpu_custom_call.1} parent=43 // pred_check
          %p285 = pneg %p94
        $region54: #{tpu_custom_call.1} parent=43 // pred_check_branch
          %287 = sbr.rel (%p285) target = $region56
        $region55: #{tpu_custom_call.1} parent=43 // pred_region
          %288 = dma.done [#allocation6], 2048
        $region56: #{tpu_custom_call.1} parent=43 // pred_fallthru
          _
        %s289 = sand.u32 %s34, 1
        %s290 = scalar_lea.sflag [#allocation3], %s289
        %s291 = sand.u32 %s34, 1
        %s292 = smul.addr %s291, 8
        %s293 = scalar_lea.vmem [#allocation2], %s292
        %p294 = pneg %p47
        %p295 = pneg %p44
        %s296 = sand.u32 %s26, 1
        %s297 = scalar_lea.sflag [#allocation6], %s296
        %s298 = sand.u32 %s60, 1
        %s299 = smul.addr %s298, 8
        %s300 = scalar_lea.vmem [#allocation5], %s299
        %p301 = pneg %p73
        %p302 = pneg %p70
        %p303 = pneg %p94
        %p304 = pneg %p91
        %p305 = pneg %p115
        %p306 = pneg %p112
        %p307 = pneg %p136
        %p308 = pneg %p133
        %p309 = pneg %p157
        %p310 = pneg %p154
        %p311 = pneg %p183
        %p312 = pneg %p180
        %s313 = sand.u32 %s170, 1
        %s314 = scalar_lea.sflag [#allocation4], %s313
        %s315 = sand.u32 %s170, 1
        %s316 = smul.addr %s315, 8
        %s317 = scalar_lea.vmem [#allocation8], %s316
        %v318 = vld [vmem:[%s280] sm:$0xff]
        %v319 = vld [vmem:[#allocation7] sm:$0xff]
        %v320 = vld [vmem:[#allocation7 + $0x8] sm:$0xff]
        %v321 = vld [vmem:[#allocation7 + $0x10] sm:$0xff]
        %v322 = vld [vmem:[#allocation7 + $0x18] sm:$0xff]
        %v323 = vld [vmem:[#allocation7 + $0x20] sm:$0xff]
        %v324 = vld [vmem:[#allocation7 + $0x28] sm:$0xff]
        %v325 = vld [vmem:[#allocation7 + $0x30] sm:$0xff]
        %v326 = vld [vmem:[#allocation7 + $0x38] sm:$0xff]
        %v327 = vld [vmem:[#allocation7 + $0x40] sm:$0xff]
        %v328 = vld [vmem:[#allocation7 + $0x48] sm:$0xff]
        %v329 = vld [vmem:[#allocation7 + $0x50] sm:$0xff]
        %v330 = vld [vmem:[#allocation7 + $0x58] sm:$0xff]
        %v331 = vld [vmem:[#allocation7 + $0x60] sm:$0xff]
        %v332 = vld [vmem:[#allocation7 + $0x68] sm:$0xff]
        %v333 = vld [vmem:[#allocation7 + $0x70] sm:$0xff]
        %v334 = vld [vmem:[#allocation7 + $0x78] sm:$0xff]
        %335 = vmatprep.subr.mxu0 0.0
        %336 = vmatpush1.msra.mxu0 %v319
        %337 = vmatprep.subr.mxu0 0.0
        %338 = vmatpush1.msra.mxu0 %v320
        %339 = vmatprep.subr.mxu0 0.0
        %340 = vmatpush1.msra.mxu0 %v321
        %341 = vmatprep.subr.mxu0 0.0
        %342 = vmatpush1.msra.mxu0 %v322
        %343 = vmatprep.subr.mxu0 0.0
        %344 = vmatpush1.msra.mxu0 %v323
        %345 = vmatprep.subr.mxu0 0.0
        %346 = vmatpush1.msra.mxu0 %v324
        %347 = vmatprep.subr.mxu0 0.0
        %348 = vmatpush1.msra.mxu0 %v325
        %349 = vmatprep.subr.mxu0 0.0
        %350 = vmatpush1.msra.mxu0 %v326
        %351 = vmatprep.subr.mxu0 0.0
        %352 = vmatpush1.msra.mxu0 %v327
        %353 = vmatprep.subr.mxu0 0.0
        %354 = vmatpush1.msra.mxu0 %v328
        %355 = vmatprep.subr.mxu0 0.0
        %356 = vmatpush1.msra.mxu0 %v329
        %357 = vmatprep.subr.mxu0 0.0
        %358 = vmatpush1.msra.mxu0 %v330
        %359 = vmatprep.subr.mxu0 0.0
        %360 = vmatpush1.msra.mxu0 %v331
        %361 = vmatprep.subr.mxu0 0.0
        %362 = vmatpush1.msra.mxu0 %v332
        %363 = vmatprep.subr.mxu0 0.0
        %364 = vmatpush1.msra.mxu0 %v333
        %365 = vmatprep.subr.mxu0 0.0
        %366 = vmatpush1.msra.mxu0 %v334
        %367 = vmatprep.subr.mxu0 0.0
        %368 = vmatpush1.msra.mxu0 0.0
        %369 = vmatprep.subr.mxu0 0.0
        %370 = vmatpush1.msra.mxu0 0.0
        %371 = vmatprep.subr.mxu0 0.0
        %372 = vmatpush1.msra.mxu0 0.0
        %373 = vmatprep.subr.mxu0 0.0
        %374 = vmatpush1.msra.mxu0 0.0
        %375 = vmatprep.subr.mxu0 0.0
        %376 = vmatpush1.msra.mxu0 0.0
        %377 = vmatprep.subr.mxu0 0.0
        %378 = vmatpush1.msra.mxu0 0.0
        %379 = vmatprep.subr.mxu0 0.0
        %380 = vmatpush1.msra.mxu0 0.0
        %381 = vmatprep.subr.mxu0 0.0
        %382 = vmatpush1.msra.mxu0 0.0
        %383 = vmatprep.subr.mxu0 0.0
        %384 = vmatpush1.msra.mxu0 0.0
        %385 = vmatprep.subr.mxu0 0.0
        %386 = vmatpush1.msra.mxu0 0.0
        %387 = vmatprep.subr.mxu0 0.0
        %388 = vmatpush1.msra.mxu0 0.0
        %389 = vmatprep.subr.mxu0 0.0
        %390 = vmatpush1.msra.mxu0 0.0
        %391 = vmatprep.subr.mxu0 0.0
        %392 = vmatpush1.msra.mxu0 0.0
        %393 = vmatprep.subr.mxu0 0.0
        %394 = vmatpush1.msra.mxu0 0.0
        %395 = vmatprep.subr.mxu0 0.0
        %396 = vmatpush1.msra.mxu0 0.0
        %397 = vmatprep.subr.mxu0 0.0
        %398 = vmatpush1.msra.mxu0 0.0
        %399 = vmatprep.mubr.f32.mxu0 0.0
        %400 = vmatmul.mubr.f32.gmra.mrb[0].mxu0 %v318
        %v401 = vpop.f32.mrb[0].mxu0
        %v402 = vadd.f32 0.0, %v401
        %v403 = vpop.f32.mrb[0].mxu0
        %404 = vdwg.mxu0
        %v405 = vld [vmem:[%s271] sm:$0xff]
        %v406 = vadd.f32 %v405, %v402
        %v407 = vld [vmem:[%s3] sm:$0x1]
        %v409 = vlaneseq
        %v410 = vshrl.u32 %v409, 7
        %v411 = vsub.s32 0, %v410
        %v412 = vrot.slane %v407, %v411
        %v414 = vadd.f32 %v406, %v412
        %415 = vadd.xlane.f32.xlu0 %v414
        %v416 = vpop.xlane.xlu0 %415
        %v417 = vrcp.pop 128.0
        %v418 = vmul.f32 %v416, %v417
        %v419 = vsub.f32 %v414, %v418
        %v420 = vmul.f32 %v419, %v419
        %421 = vadd.xlane.f32.xlu0 %v420
        %v422 = vpop.xlane.xlu0 %421
        %v423 = vmul.f32 %v422, %v417
        %v424 = vadd.f32 %v423, 1e-05
        %v425 = vrsqrt.pop %v424
        %v426 = vmul.f32 %v419, %v425
        %v427 = vld [vmem:[%s4] sm:$0x1]
        %v429 = vlaneseq
        %v430 = vshrl.u32 %v429, 7
        %v431 = vsub.s32 0, %v430
        %v432 = vrot.slane %v427, %v431
        %v434 = vmul.f32 %v426, %v432
        %v435 = vld [vmem:[%s5] sm:$0x1]
        %v437 = vlaneseq
        %v438 = vshrl.u32 %v437, 7
        %v439 = vsub.s32 0, %v438
        %v440 = vrot.slane %v435, %v439
        %v442 = vadd.f32 %v434, %v440
        %443 = vst [vmem:[%s317] sm:$0xff] %v442
        %s444 = sand.u32 %s170, 1
        %s445 = scalar_lea.sflag [#allocation4], %s444
        %s446 = sand.u32 %s170, 1
        %s447 = smul.addr %s446, 8
        %s448 = scalar_lea.vmem [#allocation8], %s447
        // Predicated region
        $region57: #{tpu_custom_call.1} parent=43 // pred_check
          %p449 = pneg %p180
        $region58: #{tpu_custom_call.1} parent=43 // pred_check_branch
          %451 = sbr.rel (%p449) target = $region60
        $region59: #{tpu_custom_call.1} parent=43 // pred_region
          %s453 = ssub.s32 128, 128
          %454 = vsyncadd %s445, %s453
          %s455 = smul.addr %s26, 128
          %s456 = scalar_lea.hbm %s6, %s455
          %s458 = sshll.u32 %s448, 4
          %s459 = int_to_ptr.vmem [resolvable:$true] %s458
          %461 = dma.vmem_to_hbm [thread:$0]  %s459, 128, %s456, %s445
        $region60: #{tpu_custom_call.1} parent=43 // pred_fallthru
          _
      $region44: #{tpu_custom_call.1} parent=5 // pred_fallthru
        _
      %p462 = scmp.le.s32.totalorder 2, %s21
      // Predicated region
      $region61: #{tpu_custom_call.1} parent=5 // pred_check
        %p463 = pneg %p462
      $region62: #{tpu_custom_call.1} parent=5 // pred_check_branch
        %465 = sbr.rel (%p463) target = $region64
      $region63: #{tpu_custom_call.1} parent=5 // pred_region
        %s466 = ssub.s32 %s21, 2
        // Predicated region
        $region65: #{tpu_custom_call.1} parent=63 // pred_check
          %p467 = pneg %p186
        $region66: #{tpu_custom_call.1} parent=63 // pred_check_branch
          %469 = sbr.rel (%p467) target = $region68
        $region67: #{tpu_custom_call.1} parent=63 // pred_region
          %s470 = sand.u32 %s171, 1
          %s471 = scalar_lea.sflag [#allocation4], %s470
          %s472 = sand.u32 %s171, 1
          %s473 = smul.addr %s472, 8
          %s474 = scalar_lea.vmem [#allocation8], %s473
          %475 = dma.done %s471, 128
        $region68: #{tpu_custom_call.1} parent=63 // pred_fallthru
          _
      $region64: #{tpu_custom_call.1} parent=5 // pred_fallthru
        _
    $region6: #{tpu_custom_call.1} parent=1 // loop_footer
      %s25 = sadd.s32 1, %s21
    $region7: #{tpu_custom_call.1} parent=1 // loop_footer_branch
      %20 = sbr.rel target = $region3
    $region8: #{tpu_custom_call.1} parent=1 // loop_exit
      _
    %476 = vsyncpa [#allocation3], 1
    %s477 = scalar_lea.sflag [#allocation3], 1
    %478 = vsyncpa %s477, 1
    %479 = vsyncpa [#allocation6], 1
    %s480 = scalar_lea.sflag [#allocation6], 1
    %481 = vsyncpa %s480, 1
    %482 = vsyncpa [#allocation4], 1
    %s483 = scalar_lea.sflag [#allocation4], 1
    %484 = vsyncpa %s483, 1

</llo_original>
